<compile_context>
chip_gen: v7x
topology: tpu7x:2x2x1
jax: 0.10.0
libtpu: 0.0.40
codegen_flags: <defaults>
</compile_context>

<pallas_src>
import functools

import numpy as np
import jax
import jax.numpy as jnp
from jax import lax
from jax.experimental import pallas as pl
from jax.experimental.pallas import tpu as pltpu


def _round_up(x, m):
    return (x + m - 1) // m * m


def _chip_kind():
    try:
        return (jax.devices()[0].device_kind or "").lower()
    except Exception:
        return ""


@functools.lru_cache(maxsize=None)
def _bf16_roll_supported():
    """Feature probe: can Mosaic lower a static bf16 lane rotation on this chip?

    bf16 packs along sublanes, so a lane roll moves half the vregs of the f32 path; the
    review asks for the bf16 roll on v6e/v7x but to keep the f32 fallback unless verified
    — this compiles a tiny probe kernel once at init time and falls back on any failure.
    """
    def probe(x_ref, o_ref):
        o_ref[...] = pltpu.roll(x_ref[...], 19, axis=1)

    try:
        fn = pl.pallas_call(
            probe, out_shape=jax.ShapeDtypeStruct((8, 384), jnp.bfloat16))
        jax.jit(fn).lower(jax.ShapeDtypeStruct((8, 384), jnp.bfloat16)).compile()
        return True
    except Exception:
        return False


def _vmem_bytes_per_step(bt, p_seg, c_sub, c_out, kk, out_bytes):
    n = bt * p_seg
    x_blk = 2 * bt * c_sub * p_seg * 2           # double-buffered bf16 input block
    o_blk = 2 * bt * c_out * p_seg * out_bytes   # double-buffered output block
    slab = kk * c_sub * n * 2                    # stacked bf16 tap slab (scratch)
    acc = c_out * n * 4                          # f32 matmul result temporary
    w = 2 * c_out * kk * c_sub * 2               # resident weights
    return x_blk + o_blk + slab + acc + w


def _pick_batch_tile(B, p_seg, c_sub, c_out, kk, *, target_lanes, min_grid,
                     vmem_budget, out_bytes):
    """Pack batches into the matmul N (lane) dim.

    Wide tiles amortize the ~0.35us per-grid-step overhead and keep the output stores
    lane-dense; the tile is only shrunk to respect the per-chip VMEM budget and to leave
    at least `min_grid` steps (one per TensorCore: 2 on v7x, 1 on v5e/v6e).
    """
    bt = max(1, min(B, target_lanes // max(p_seg, 1)))
    while bt > 1 and _vmem_bytes_per_step(bt, p_seg, c_sub, c_out, kk, out_bytes) > vmem_budget:
        bt -= 1
    while bt > 1 and pl.cdiv(B, bt) < min_grid:
        bt -= 1
    return bt


def _conv_kernel(w_ref, x_ref, o_ref, slab_ref, *, shifts, p_seg, roll_f32):
    """One batch tile.

    w_ref    : [C_out, KK*C_sub]          bf16  (tap (0,0) carries the bias column)
    x_ref    : [bt, C_sub, p_seg]         bf16  (flattened padded image + ones row)
    o_ref    : [bt, C_out, p_seg]         f32/bf16
    slab_ref : [KK*C_sub, bt*p_seg] VMEM  bf16  (stacked lane-rotated tap copies)
    """
    bt, c_sub, _ = x_ref.shape

    # Build the stacked tap slab: for every batch segment and tap, a static lane rotation
    # of the padded image written to an (8,128)-aligned scratch slice.  Retained output
    # lanes never read wrapped/zero-padded lanes (guaranteed by the wrapper crop).
    for b in range(bt):
        xb = x_ref[b]                                       # [C_sub, p_seg] bf16
        xb_roll = xb.astype(jnp.float32) if roll_f32 else xb
        for t, s in enumerate(shifts):
            if s == 0:
                rolled = xb
            else:
                r = pltpu.roll(xb_roll, p_seg - s, axis=1)  # left shift by s lanes
                rolled = r.astype(jnp.bfloat16) if roll_f32 else r
            slab_ref[t * c_sub:(t + 1) * c_sub, b * p_seg:(b + 1) * p_seg] = rolled

    # Single MXU matmul per tile (contraction = KK*C_sub), f32 accumulation.
    acc = jnp.dot(w_ref[...], slab_ref[...], preferred_element_type=jnp.float32)

    # Transpose-free output: per-batch lane slices (p_seg is a multiple of 128).
    for b in range(bt):
        o_ref[b] = acc[:, b * p_seg:(b + 1) * p_seg].astype(o_ref.dtype)


def augment_weights(w_oihw, bias, kernel_size):
    """Init-time glue: fold dense OIHW weights + bias into the matmul LHS.

    Column t*C_sub + c holds weight[:, c, kh, kw] for tap t = kh*K + kw; column C_in of
    tap 0 holds the bias (paired with a ones row in the image); C_sub = C_in+1 rounded up
    to 8 so every tap group in the slab is sublane-aligned.  Built once, not per forward.
    """
    w_np = np.asarray(w_oihw, np.float32)
    b_np = np.asarray(bias, np.float32)
    c_out, c_in, K, _ = w_np.shape
    assert K == kernel_size
    c_sub = _round_up(c_in + 1, 8)
    w2d = np.zeros((c_out, K * K * c_sub), np.float32)
    for kh in range(K):
        for kw in range(K):
            t = kh * K + kw
            w2d[:, t * c_sub:t * c_sub + c_in] = w_np[:, :, kh, kw]
    w2d[:, c_in] = b_np                                     # bias column (tap (0,0))
    return jnp.asarray(w2d, dtype=jnp.bfloat16)


def reconv_forward(images, w2d, *, kernel_size, stride, padding, H_out, W_out,
                   target_lanes=16384, out_dtype=jnp.float32):
    """conv2d(images, W, stride, padding) + bias  (NCHW, matches ReConv_torch.forward)."""
    B, C_in, H, W = images.shape
    K = kernel_size
    KK = K * K
    C_sub = _round_up(C_in + 1, 8)
    C_out = int(w2d.shape[0])
    assert w2d.shape[1] == KK * C_sub, "w2d must come from augment_weights()"

    H_pad, W_pad = H + 2 * padding, W + 2 * padding
    p_pad = H_pad * W_pad                       # flattened padded spatial extent
    p_seg = _round_up(p_pad, 128)               # lane-dense per-batch segment
    shifts = tuple(kh * W_pad + kw for kh in range(K) for kw in range(K))

    # --- chip-aware knobs (trace-time Python only) ---------------------------------
    kind = _chip_kind()
    is_v7 = ("v7" in kind) or ("tpu7" in kind)
    is_v6 = "v6" in kind
    use_bf16_roll = (is_v6 or is_v7) and _bf16_roll_supported()
    roll_f32 = not use_bf16_roll                # proven fallback path (v5e / unknown)
    min_grid = 2 if is_v7 else 1                # feed both v7x TCs; don't split 1-TC chips
    vmem_budget = (24 << 20) if is_v7 else (64 << 20)
    vmem_limit = (40 << 20) if is_v7 else (64 << 20)

    out_bytes = np.dtype(out_dtype).itemsize
    batch_tile = _pick_batch_tile(B, p_seg, C_sub, C_out, KK,
                                  target_lanes=target_lanes, min_grid=min_grid,
                                  vmem_budget=vmem_budget, out_bytes=out_bytes)
    n_tiles = pl.cdiv(B, batch_tile)
    B_padded = n_tiles * batch_tile             # pad batch instead of shrinking the tile

    # --- image prep: bf16 from the start, pad, flatten, append ones row, align lanes ---
    x = images.astype(jnp.bfloat16)
    if padding:
        x = jnp.pad(x, ((0, 0), (0, 0), (padding, padding), (padding, padding)))
    x = x.reshape(B, C_in, p_pad)
    ones = jnp.ones((B, 1, p_pad), jnp.bfloat16)              # pairs with the bias column
    x = jnp.concatenate([x, ones], axis=1)                    # (B, C_in+1, p_pad)
    x = jnp.pad(x, ((0, B_padded - B), (0, C_sub - (C_in + 1)), (0, p_seg - p_pad)))

    out3 = pl.pallas_call(
        functools.partial(_conv_kernel, shifts=shifts, p_seg=p_seg, roll_f32=roll_f32),
        out_shape=jax.ShapeDtypeStruct((B_padded, C_out, p_seg), out_dtype),
        grid=(n_tiles,),
        in_specs=[
            # weights + bias: constant index map -> resident in VMEM across the grid
            pl.BlockSpec((C_out, KK * C_sub), lambda n: (0, 0)),
            # this tile's batches (lane-dense 128-aligned per-batch segments)
            pl.BlockSpec((batch_tile, C_sub, p_seg), lambda n: (n, 0, 0)),
        ],
        out_specs=pl.BlockSpec((batch_tile, C_out, p_seg), lambda n: (n, 0, 0)),
        scratch_shapes=[pltpu.VMEM((KK * C_sub, batch_tile * p_seg), jnp.bfloat16)],
        compiler_params=pltpu.CompilerParams(
            dimension_semantics=("parallel",),
            vmem_limit_bytes=vmem_limit,
        ),
    )(w2d, x)

    # --- crop the stride-1 response on the padded grid to [B, C_out, H_out, W_out] ---
    out = out3[:B, :, :p_pad].reshape(B, C_out, H_pad, W_pad)
    # TODO(synk): for stride > 1 this computes the stride-1 response and subsamples in
    # the wrapper; selecting the strided output lanes inside the kernel would avoid the
    # ~stride^2 wasted MXU work and output DMA.
    return out[:, :, ::stride, ::stride][:, :, :H_out, :W_out]


def build_sparse_params(C_in, C_out, K, rng):
    """Synthetic deterministic weight_state_dict / bias_state_dict in the module's format."""
    weight_index, weight_value, filter_lengths, start_points = [], [], [], []
    for _oc in range(C_out):
        start_points.append(len(weight_index))
        n_nz = 0
        for c in range(C_in):
            for kh in range(K):
                for kw in range(K):
                    if rng.random() < 0.5:  # ~50% sparsity
                        weight_index.append(c * 100 + kh * 10 + kw)
                        weight_value.append(float(rng.standard_normal()))
                        n_nz += 1
        filter_lengths.append(n_nz)
    weight_sd = (
        np.asarray(weight_index, np.int64),
        np.asarray(weight_value, np.float32),
        np.asarray(filter_lengths, np.int64),
        np.asarray(start_points, np.int64),
    )
    bias_channels = [oc for oc in range(C_out) if rng.random() < 0.6]
    bias_values = [float(rng.standard_normal()) for _ in bias_channels]
    bias_sd = (np.asarray(bias_channels, np.int64), np.asarray(bias_values, np.float32))
    return weight_sd, bias_sd


def densify(weight_sd, bias_sd, C_in, C_out, K):
    """Reconstruct dense OIHW weights and per-channel bias from the sparse encoding."""
    w_idx, w_val, f_len, s_pt = weight_sd
    W = np.zeros((C_out, C_in, K, K), np.float32)
    for oc in range(C_out):
        for i in range(int(f_len[oc])):
            loc = int(s_pt[oc]) + i
            idx = int(w_idx[loc])
            W[oc, idx // 100, (idx // 10) % 10, idx % 10] += float(w_val[loc])
    b = np.zeros((C_out,), np.float32)
    for ci, bv in zip(bias_sd[0], bias_sd[1]):
        b[int(ci)] += float(bv)
    return W, b


if __name__ == "__main__":
    B, C_in, C_out, K = 2, 4, 8, 3
    H = W = 16
    stride, padding = 1, 1
    H_out = (H - K + 2 * padding) // stride + 1
    W_out = (W - K + 2 * padding) // stride + 1

    rng = np.random.default_rng(0)
    weight_sd, bias_sd = build_sparse_params(C_in, C_out, K, rng)
    W_dense, b_dense = densify(weight_sd, bias_sd, C_in, C_out, K)

    # Init-time: densify + fold bias into the matmul weights once (hoisted out of forward).
    w2d = augment_weights(W_dense, b_dense, K)
    fwd = jax.jit(functools.partial(
        reconv_forward, kernel_size=K, stride=stride, padding=padding,
        H_out=H_out, W_out=W_out))

    x = jax.random.normal(jax.random.PRNGKey(0), (B, C_in, H, W), dtype=jnp.float32)

    out = jax.block_until_ready(fwd(x, w2d))
    assert out.shape == (B, C_out, H_out, W_out)

    conv_kwargs = dict(
        window_strides=(stride, stride),
        padding=[(padding, padding), (padding, padding)],
        dimension_numbers=("NCHW", "OIHW", "NCHW"),
        precision=lax.Precision.HIGHEST,
    )

    # Tight check vs a reference computed at the kernel's input precision (bf16 operands,
    # f32 accumulation): differences are summation-order only.
    x_bf = x.astype(jnp.bfloat16).astype(jnp.float32)
    w_bf = jnp.asarray(W_dense).astype(jnp.bfloat16).astype(jnp.float32)
    b_bf = jnp.asarray(b_dense).astype(jnp.bfloat16).astype(jnp.float32)
    ref_bf = lax.conv_general_dilated(x_bf, w_bf, **conv_kwargs) + b_bf[None, :, None, None]
    assert jnp.allclose(out, ref_bf, atol=2e-3, rtol=2e-3)

    # Loose sanity check vs the full-f32 reference (bf16 MXU inputs -> looser tolerance).
    ref_f32 = lax.conv_general_dilated(x, jnp.asarray(W_dense), **conv_kwargs) \
        + jnp.asarray(b_dense)[None, :, None, None]
    assert jnp.allclose(out, ref_f32, atol=2e-1, rtol=1e-1)

    print("KERNEL_OK")
</pallas_src>

<mosaic_0001>
module attributes {stable_mosaic.version = 11 : i64} {
  func.func @_conv_kernel(%arg0: i32, %arg1: memref<8x72xbf16, #tpu.memory_space<vmem>>, %arg2: memref<2x8x384xbf16, #tpu.memory_space<vmem>>, %arg3: memref<2x8x384xf32, #tpu.memory_space<vmem>>, %arg4: memref<72x768xbf16, #tpu.memory_space<vmem>>) attributes {dimension_semantics = [#tpu.dimension_semantics<parallel>], iteration_bounds = array<i64: 1>, scalar_prefetch = 0 : i64, scratch_operands = 1 : i64, tpu.core_type = #tpu.core_type<tc>, window_params = [{pipeline_mode = #tpu.pipeline_mode<synchronous>, transform_indices = @transform_0, window_bounds = array<i64: 8, 72>}, {transform_indices = @transform_1, window_bounds = array<i64: 2, 8, 384>}, {transform_indices = @transform_2, window_bounds = array<i64: 2, 8, 384>}]} {
    %c0 = arith.constant 0 : index
    %c0_0 = arith.constant 0 : index
    %c0_1 = arith.constant 0 : index
    %0 = vector.load %arg2[%c0, %c0_0, %c0_1] : memref<2x8x384xbf16, #tpu.memory_space<vmem>>, vector<1x8x384xbf16>
    %1 = vector.shape_cast %0 : vector<1x8x384xbf16> to vector<8x384xbf16>
    %2 = arith.extf %1 : vector<8x384xbf16> to vector<8x384xf32>
    %c0_2 = arith.constant 0 : index
    %c0_3 = arith.constant 0 : index
    %3 = vector.load %arg4[%c0_2, %c0_3] : memref<72x768xbf16, #tpu.memory_space<vmem>>, vector<8x384xbf16>
    tpu.vector_store %arg4[%c0_2, %c0_3], %1 {strides = array<i32>} : memref<72x768xbf16, #tpu.memory_space<vmem>>, vector<8x384xbf16>,
    %c383_i32 = arith.constant 383 : i32
    %4 = tpu.dynamic_rotate %2 by %c383_i32 dim 1 : vector<8x384xf32>, i32 -> vector<8x384xf32>
    %5 = arith.truncf %4 : vector<8x384xf32> to vector<8x384xbf16>
    %c8 = arith.constant 8 : index
    %c0_4 = arith.constant 0 : index
    %6 = vector.load %arg4[%c8, %c0_4] : memref<72x768xbf16, #tpu.memory_space<vmem>>, vector<8x384xbf16>
    tpu.vector_store %arg4[%c8, %c0_4], %5 {strides = array<i32>} : memref<72x768xbf16, #tpu.memory_space<vmem>>, vector<8x384xbf16>,
    %c382_i32 = arith.constant 382 : i32
    %7 = tpu.dynamic_rotate %2 by %c382_i32 dim 1 : vector<8x384xf32>, i32 -> vector<8x384xf32>
    %8 = arith.truncf %7 : vector<8x384xf32> to vector<8x384xbf16>
    %c16 = arith.constant 16 : index
    %c0_5 = arith.constant 0 : index
    %9 = vector.load %arg4[%c16, %c0_5] : memref<72x768xbf16, #tpu.memory_space<vmem>>, vector<8x384xbf16>
    tpu.vector_store %arg4[%c16, %c0_5], %8 {strides = array<i32>} : memref<72x768xbf16, #tpu.memory_space<vmem>>, vector<8x384xbf16>,
    %c366_i32 = arith.constant 366 : i32
    %10 = tpu.dynamic_rotate %2 by %c366_i32 dim 1 : vector<8x384xf32>, i32 -> vector<8x384xf32>
    %11 = arith.truncf %10 : vector<8x384xf32> to vector<8x384xbf16>
    %c24 = arith.constant 24 : index
    %c0_6 = arith.constant 0 : index
    %12 = vector.load %arg4[%c24, %c0_6] : memref<72x768xbf16, #tpu.memory_space<vmem>>, vector<8x384xbf16>
    tpu.vector_store %arg4[%c24, %c0_6], %11 {strides = array<i32>} : memref<72x768xbf16, #tpu.memory_space<vmem>>, vector<8x384xbf16>,
    %c365_i32 = arith.constant 365 : i32
    %13 = tpu.dynamic_rotate %2 by %c365_i32 dim 1 : vector<8x384xf32>, i32 -> vector<8x384xf32>
    %14 = arith.truncf %13 : vector<8x384xf32> to vector<8x384xbf16>
    %c32 = arith.constant 32 : index
    %c0_7 = arith.constant 0 : index
    %15 = vector.load %arg4[%c32, %c0_7] : memref<72x768xbf16, #tpu.memory_space<vmem>>, vector<8x384xbf16>
    tpu.vector_store %arg4[%c32, %c0_7], %14 {strides = array<i32>} : memref<72x768xbf16, #tpu.memory_space<vmem>>, vector<8x384xbf16>,
    %c364_i32 = arith.constant 364 : i32
    %16 = tpu.dynamic_rotate %2 by %c364_i32 dim 1 : vector<8x384xf32>, i32 -> vector<8x384xf32>
    %17 = arith.truncf %16 : vector<8x384xf32> to vector<8x384xbf16>
    %c40 = arith.constant 40 : index
    %c0_8 = arith.constant 0 : index
    %18 = vector.load %arg4[%c40, %c0_8] : memref<72x768xbf16, #tpu.memory_space<vmem>>, vector<8x384xbf16>
    tpu.vector_store %arg4[%c40, %c0_8], %17 {strides = array<i32>} : memref<72x768xbf16, #tpu.memory_space<vmem>>, vector<8x384xbf16>,
    %c348_i32 = arith.constant 348 : i32
    %19 = tpu.dynamic_rotate %2 by %c348_i32 dim 1 : vector<8x384xf32>, i32 -> vector<8x384xf32>
    %20 = arith.truncf %19 : vector<8x384xf32> to vector<8x384xbf16>
    %c48 = arith.constant 48 : index
    %c0_9 = arith.constant 0 : index
    %21 = vector.load %arg4[%c48, %c0_9] : memref<72x768xbf16, #tpu.memory_space<vmem>>, vector<8x384xbf16>
    tpu.vector_store %arg4[%c48, %c0_9], %20 {strides = array<i32>} : memref<72x768xbf16, #tpu.memory_space<vmem>>, vector<8x384xbf16>,
    %c347_i32 = arith.constant 347 : i32
    %22 = tpu.dynamic_rotate %2 by %c347_i32 dim 1 : vector<8x384xf32>, i32 -> vector<8x384xf32>
    %23 = arith.truncf %22 : vector<8x384xf32> to vector<8x384xbf16>
    %c56 = arith.constant 56 : index
    %c0_10 = arith.constant 0 : index
    %24 = vector.load %arg4[%c56, %c0_10] : memref<72x768xbf16, #tpu.memory_space<vmem>>, vector<8x384xbf16>
    tpu.vector_store %arg4[%c56, %c0_10], %23 {strides = array<i32>} : memref<72x768xbf16, #tpu.memory_space<vmem>>, vector<8x384xbf16>,
    %c346_i32 = arith.constant 346 : i32
    %25 = tpu.dynamic_rotate %2 by %c346_i32 dim 1 : vector<8x384xf32>, i32 -> vector<8x384xf32>
    %26 = arith.truncf %25 : vector<8x384xf32> to vector<8x384xbf16>
    %c64 = arith.constant 64 : index
    %c0_11 = arith.constant 0 : index
    %27 = vector.load %arg4[%c64, %c0_11] : memref<72x768xbf16, #tpu.memory_space<vmem>>, vector<8x384xbf16>
    tpu.vector_store %arg4[%c64, %c0_11], %26 {strides = array<i32>} : memref<72x768xbf16, #tpu.memory_space<vmem>>, vector<8x384xbf16>,
    %c1 = arith.constant 1 : index
    %c0_12 = arith.constant 0 : index
    %c0_13 = arith.constant 0 : index
    %28 = vector.load %arg2[%c1, %c0_12, %c0_13] : memref<2x8x384xbf16, #tpu.memory_space<vmem>>, vector<1x8x384xbf16>
    %29 = vector.shape_cast %28 : vector<1x8x384xbf16> to vector<8x384xbf16>
    %30 = arith.extf %29 : vector<8x384xbf16> to vector<8x384xf32>
    %c0_14 = arith.constant 0 : index
    %c384 = arith.constant 384 : index
    %31 = vector.load %arg4[%c0_14, %c384] : memref<72x768xbf16, #tpu.memory_space<vmem>>, vector<8x384xbf16>
    tpu.vector_store %arg4[%c0_14, %c384], %29 {strides = array<i32>} : memref<72x768xbf16, #tpu.memory_space<vmem>>, vector<8x384xbf16>,
    %c383_i32_15 = arith.constant 383 : i32
    %32 = tpu.dynamic_rotate %30 by %c383_i32_15 dim 1 : vector<8x384xf32>, i32 -> vector<8x384xf32>
    %33 = arith.truncf %32 : vector<8x384xf32> to vector<8x384xbf16>
    %c8_16 = arith.constant 8 : index
    %c384_17 = arith.constant 384 : index
    %34 = vector.load %arg4[%c8_16, %c384_17] : memref<72x768xbf16, #tpu.memory_space<vmem>>, vector<8x384xbf16>
    tpu.vector_store %arg4[%c8_16, %c384_17], %33 {strides = array<i32>} : memref<72x768xbf16, #tpu.memory_space<vmem>>, vector<8x384xbf16>,
    %c382_i32_18 = arith.constant 382 : i32
    %35 = tpu.dynamic_rotate %30 by %c382_i32_18 dim 1 : vector<8x384xf32>, i32 -> vector<8x384xf32>
    %36 = arith.truncf %35 : vector<8x384xf32> to vector<8x384xbf16>
    %c16_19 = arith.constant 16 : index
    %c384_20 = arith.constant 384 : index
    %37 = vector.load %arg4[%c16_19, %c384_20] : memref<72x768xbf16, #tpu.memory_space<vmem>>, vector<8x384xbf16>
    tpu.vector_store %arg4[%c16_19, %c384_20], %36 {strides = array<i32>} : memref<72x768xbf16, #tpu.memory_space<vmem>>, vector<8x384xbf16>,
    %c366_i32_21 = arith.constant 366 : i32
    %38 = tpu.dynamic_rotate %30 by %c366_i32_21 dim 1 : vector<8x384xf32>, i32 -> vector<8x384xf32>
    %39 = arith.truncf %38 : vector<8x384xf32> to vector<8x384xbf16>
    %c24_22 = arith.constant 24 : index
    %c384_23 = arith.constant 384 : index
    %40 = vector.load %arg4[%c24_22, %c384_23] : memref<72x768xbf16, #tpu.memory_space<vmem>>, vector<8x384xbf16>
    tpu.vector_store %arg4[%c24_22, %c384_23], %39 {strides = array<i32>} : memref<72x768xbf16, #tpu.memory_space<vmem>>, vector<8x384xbf16>,
    %c365_i32_24 = arith.constant 365 : i32
    %41 = tpu.dynamic_rotate %30 by %c365_i32_24 dim 1 : vector<8x384xf32>, i32 -> vector<8x384xf32>
    %42 = arith.truncf %41 : vector<8x384xf32> to vector<8x384xbf16>
    %c32_25 = arith.constant 32 : index
    %c384_26 = arith.constant 384 : index
    %43 = vector.load %arg4[%c32_25, %c384_26] : memref<72x768xbf16, #tpu.memory_space<vmem>>, vector<8x384xbf16>
    tpu.vector_store %arg4[%c32_25, %c384_26], %42 {strides = array<i32>} : memref<72x768xbf16, #tpu.memory_space<vmem>>, vector<8x384xbf16>,
    %c364_i32_27 = arith.constant 364 : i32
    %44 = tpu.dynamic_rotate %30 by %c364_i32_27 dim 1 : vector<8x384xf32>, i32 -> vector<8x384xf32>
    %45 = arith.truncf %44 : vector<8x384xf32> to vector<8x384xbf16>
    %c40_28 = arith.constant 40 : index
    %c384_29 = arith.constant 384 : index
    %46 = vector.load %arg4[%c40_28, %c384_29] : memref<72x768xbf16, #tpu.memory_space<vmem>>, vector<8x384xbf16>
    tpu.vector_store %arg4[%c40_28, %c384_29], %45 {strides = array<i32>} : memref<72x768xbf16, #tpu.memory_space<vmem>>, vector<8x384xbf16>,
    %c348_i32_30 = arith.constant 348 : i32
    %47 = tpu.dynamic_rotate %30 by %c348_i32_30 dim 1 : vector<8x384xf32>, i32 -> vector<8x384xf32>
    %48 = arith.truncf %47 : vector<8x384xf32> to vector<8x384xbf16>
    %c48_31 = arith.constant 48 : index
    %c384_32 = arith.constant 384 : index
    %49 = vector.load %arg4[%c48_31, %c384_32] : memref<72x768xbf16, #tpu.memory_space<vmem>>, vector<8x384xbf16>
    tpu.vector_store %arg4[%c48_31, %c384_32], %48 {strides = array<i32>} : memref<72x768xbf16, #tpu.memory_space<vmem>>, vector<8x384xbf16>,
    %c347_i32_33 = arith.constant 347 : i32
    %50 = tpu.dynamic_rotate %30 by %c347_i32_33 dim 1 : vector<8x384xf32>, i32 -> vector<8x384xf32>
    %51 = arith.truncf %50 : vector<8x384xf32> to vector<8x384xbf16>
    %c56_34 = arith.constant 56 : index
    %c384_35 = arith.constant 384 : index
    %52 = vector.load %arg4[%c56_34, %c384_35] : memref<72x768xbf16, #tpu.memory_space<vmem>>, vector<8x384xbf16>
    tpu.vector_store %arg4[%c56_34, %c384_35], %51 {strides = array<i32>} : memref<72x768xbf16, #tpu.memory_space<vmem>>, vector<8x384xbf16>,
    %c346_i32_36 = arith.constant 346 : i32
    %53 = tpu.dynamic_rotate %30 by %c346_i32_36 dim 1 : vector<8x384xf32>, i32 -> vector<8x384xf32>
    %54 = arith.truncf %53 : vector<8x384xf32> to vector<8x384xbf16>
    %c64_37 = arith.constant 64 : index
    %c384_38 = arith.constant 384 : index
    %55 = vector.load %arg4[%c64_37, %c384_38] : memref<72x768xbf16, #tpu.memory_space<vmem>>, vector<8x384xbf16>
    tpu.vector_store %arg4[%c64_37, %c384_38], %54 {strides = array<i32>} : memref<72x768xbf16, #tpu.memory_space<vmem>>, vector<8x384xbf16>,
    %c0_39 = arith.constant 0 : index
    %c0_40 = arith.constant 0 : index
    %56 = vector.load %arg1[%c0_39, %c0_40] : memref<8x72xbf16, #tpu.memory_space<vmem>>, vector<8x72xbf16>
    %c0_41 = arith.constant 0 : index
    %c0_42 = arith.constant 0 : index
    %57 = vector.load %arg4[%c0_41, %c0_42] : memref<72x768xbf16, #tpu.memory_space<vmem>>, vector<72x768xbf16>
    %cst = arith.constant dense<0.000000e+00> : vector<8x768xf32>
    %58 = tpu.matmul %56, %57, %cst {dimension_numbers = #tpu.dot_dimension_numbers<[1], [0], [0], [1], [0, 0, 1, 1], [], []>} : vector<8x72xbf16>, vector<72x768xbf16>, vector<8x768xf32> -> vector<8x768xf32>
    %59 = vector.extract_strided_slice %58 {offsets = [0, 0], sizes = [8, 384], strides = [1, 1]} : vector<8x768xf32> to vector<8x384xf32>
    %c0_43 = arith.constant 0 : index
    %c0_44 = arith.constant 0 : index
    %c0_45 = arith.constant 0 : index
    %60 = vector.load %arg3[%c0_43, %c0_44, %c0_45] : memref<2x8x384xf32, #tpu.memory_space<vmem>>, vector<1x8x384xf32>
    %61 = vector.shape_cast %60 : vector<1x8x384xf32> to vector<8x384xf32>
    %62 = vector.shape_cast %59 : vector<8x384xf32> to vector<1x8x384xf32>
    tpu.vector_store %arg3[%c0_43, %c0_44, %c0_45], %62 {strides = array<i32>} : memref<2x8x384xf32, #tpu.memory_space<vmem>>, vector<1x8x384xf32>,
    %63 = vector.extract_strided_slice %58 {offsets = [0, 384], sizes = [8, 384], strides = [1, 1]} : vector<8x768xf32> to vector<8x384xf32>
    %c1_46 = arith.constant 1 : index
    %c0_47 = arith.constant 0 : index
    %c0_48 = arith.constant 0 : index
    %64 = vector.load %arg3[%c1_46, %c0_47, %c0_48] : memref<2x8x384xf32, #tpu.memory_space<vmem>>, vector<1x8x384xf32>
    %65 = vector.shape_cast %64 : vector<1x8x384xf32> to vector<8x384xf32>
    %66 = vector.shape_cast %63 : vector<8x384xf32> to vector<1x8x384xf32>
    tpu.vector_store %arg3[%c1_46, %c0_47, %c0_48], %66 {strides = array<i32>} : memref<2x8x384xf32, #tpu.memory_space<vmem>>, vector<1x8x384xf32>,
    return
  }
  func.func @transform_0(%arg0: i32) -> (i32, i32) {
    %c0_i32 = arith.constant 0 : i32
    %c0_i32_0 = arith.constant 0 : i32
    %c0_i32_1 = arith.constant 0 : i32
    return %c0_i32, %c0_i32_0 : i32, i32
  }
  func.func @transform_1(%arg0: i32) -> (i32, i32, i32) {
    %c0_i32 = arith.constant 0 : i32
    %c0_i32_0 = arith.constant 0 : i32
    %c0_i32_1 = arith.constant 0 : i32
    return %arg0, %c0_i32, %c0_i32_0 : i32, i32, i32
  }
  func.func @transform_2(%arg0: i32) -> (i32, i32, i32) {
    %c0_i32 = arith.constant 0 : i32
    %c0_i32_0 = arith.constant 0 : i32
    %c0_i32_1 = arith.constant 0 : i32
    return %arg0, %c0_i32, %c0_i32_0 : i32, i32, i32
  }
}

</mosaic_0001>

<llo_original>
// kernel: reconv_forward.1
$region0: #{reconv_forward.1}
  #allocation0 [shape = 'u32[]', space=smem, size = 0x4, offset = 0x4, fixed_abs, tag = 'smem constant byte address 0x4 - core index']
  #allocation1 [shape = 'u32[144,128]{1,0:T(1,128)}', space=vmem, size = 0x12000, scoped, tag = 'internal scratch']
  #allocation2 [shape = 'bf16[72,768]{1,0:T(8,128)(2,1)}', space=vmem, size = 0x1b000, scoped, tag = 'scratch operand']
  %s0 = inlined_call_operand.hbm [shape: bf16[8,72], index: 0, kind: input, shape index: {}]
  %s1 = inlined_call_operand.hbm [shape: bf16[2,8,384], index: 1, kind: input, shape index: {}]
  %s2 = inlined_call_operand.hbm [shape: f32[2,8,384], index: 2, kind: output, shape index: {}]
  %s3 = sld [smem:[#allocation0]]
  $region26: #{reconv_forward.1} parent=0
    _
  %s5 = ssub.s32 1, %s3
  %s6 = scalar_select 0, %s5, %s3
  $region1: #{reconv_forward.1} parent=0
    #allocation3 [shape = 'u8[2048]{0}', space=vmem, size = 0x800, scoped, tag = 'input window, operand 0, single buffered']
    #allocation4 [shape = 's32[1]{0}', space=sflag, size = 0x4, scoped, tag = 'scoped memory for reconv_forward.1']
    #allocation5 [shape = 's32[1]{0}', space=sflag, size = 0x4, scoped, tag = 'scoped memory for reconv_forward.1']
    #allocation6 [shape = 'u8[12288]{0}', space=vmem, size = 0x3000, scoped, tag = 'input window, operand 1, single buffered']
    #allocation7 [shape = 's32[1]{0}', space=sflag, size = 0x4, scoped, tag = 'scoped memory for reconv_forward.1']
    #allocation8 [shape = 'u8[24576]{0}', space=vmem, size = 0x6000, scoped, tag = 'output window, operand 0, single buffered']
    %7 = vsyncpa [#allocation4], 0
    %8 = vsyncpa [#allocation7], 0
    %9 = vsyncpa [#allocation5], 0
    // Predicated region
    $region2: #{reconv_forward.1} parent=1 // pred_check
      _
    $region3: #{reconv_forward.1} parent=1 // pred_check_branch
      %11 = sbr.rel (0) target = $region5
    $region4: #{reconv_forward.1} parent=1 // pred_region
      %s13 = ssub.s32 64, 64
      %14 = vsyncadd [#allocation4], %s13
      %s16 = sshll.u32 [#allocation3], 4
      %s17 = int_to_ptr.vmem [resolvable:$true] %s16
      %19 = dma.hbm_to_vmem [thread:$0]  %s0, 64, %s17, [#allocation4]
    $region5: #{reconv_forward.1} parent=1 // pred_fallthru
      _
    // Predicated region
    $region6: #{reconv_forward.1} parent=1 // pred_check
      _
    $region7: #{reconv_forward.1} parent=1 // pred_check_branch
      %21 = sbr.rel (0) target = $region9
    $region8: #{reconv_forward.1} parent=1 // pred_region
      %s23 = ssub.s32 384, 384
      %24 = vsyncadd [#allocation7], %s23
      %s25 = sshll.u32 [#allocation6], 4
      %s26 = int_to_ptr.vmem [resolvable:$true] %s25
      %31 = dma.hbm_to_vmem [thread:$0]  %s1, 384, %s26, [#allocation7], 192, 192, 12
    $region9: #{reconv_forward.1} parent=1 // pred_fallthru
      _
    // Predicated region
    $region10: #{reconv_forward.1} parent=1 // pred_check
      _
    $region11: #{reconv_forward.1} parent=1 // pred_check_branch
      %33 = sbr.rel (0) target = $region13
    $region12: #{reconv_forward.1} parent=1 // pred_region
      %34 = dma.done [#allocation4], 64
    $region13: #{reconv_forward.1} parent=1 // pred_fallthru
      _
    // Predicated region
    $region14: #{reconv_forward.1} parent=1 // pred_check
      _
    $region15: #{reconv_forward.1} parent=1 // pred_check_branch
      %36 = sbr.rel (0) target = $region17
    $region16: #{reconv_forward.1} parent=1 // pred_region
      %37 = dma.done [#allocation7], 384
    $region17: #{reconv_forward.1} parent=1 // pred_fallthru
      _
    %v39 = vld [vmem:[#allocation6] sm:$0xff]
    %v40 = vld [vmem:[#allocation6 + $0x8] sm:$0xf]
    %v41 = vunpack.c.l.bf16 %v39
    %v42 = vunpack.c.h.bf16 %v39
    %v43 = vunpack.c.l.bf16 %v40
    %44 = vst [vmem:[#allocation2] sm:$0xff] %v39
    %45 = vst [vmem:[#allocation2 + $0x8] sm:$0xf] %v40
    %46 = vrot.lane.b32.xlu0 %v41, 127
    %v47 = vpop.permute.xlu0 %46
    %48 = vrot.lane.b32.xlu0 %v42, 127
    %v49 = vpop.permute.xlu0 %48
    %50 = vrot.lane.b32.xlu0 %v43, 127
    %v51 = vpop.permute.xlu0 %50
    %v52 = vlaneseq
    %v53 = vand.u32 %v52, 127
    %vm54 = vcmp.lt.s32.totalorder %v53, 127
    %v55 = vsel %vm54, %v49, %v51
    %v56 = vsel %vm54, %v47, %v49
    %v57 = vsel %vm54, %v51, %v47
    %v58 = vpack.c.bf16 %v56, %v56
    %v59 = vpack.c.bf16 %v55, %v55
    %v60 = vpack.c.bf16 %v57, %v57
    %v64 = vunpack.c.l.b16 %v58
    %v65 = vunpack.c.l.b16 %v59
    %v66 = vunpack.c.l.b16 %v60
    %v67 = vpack.c.b16 %v65, %v64
    %v68 = vpack.c.b16 %v66, %v66
    %71 = vst [vmem:[#allocation2 + $0x18] sm:$0xff] %v67
    %72 = vst [vmem:[#allocation2 + $0x20] sm:$0xf] %v68
    %73 = vrot.lane.b32.xlu0 %v41, 126
    %v74 = vpop.permute.xlu0 %73
    %75 = vrot.lane.b32.xlu0 %v42, 126
    %v76 = vpop.permute.xlu0 %75
    %77 = vrot.lane.b32.xlu0 %v43, 126
    %v78 = vpop.permute.xlu0 %77
    %vm79 = vcmp.lt.s32.totalorder %v53, 126
    %v80 = vsel %vm79, %v76, %v78
    %v81 = vsel %vm79, %v74, %v76
    %v82 = vsel %vm79, %v78, %v74
    %v83 = vpack.c.bf16 %v81, %v81
    %v84 = vpack.c.bf16 %v80, %v80
    %v85 = vpack.c.bf16 %v82, %v82
    %v89 = vunpack.c.l.b16 %v83
    %v90 = vunpack.c.l.b16 %v84
    %v91 = vunpack.c.l.b16 %v85
    %v92 = vpack.c.b16 %v90, %v89
    %v93 = vpack.c.b16 %v91, %v91
    %96 = vst [vmem:[#allocation2 + $0x30] sm:$0xff] %v92
    %97 = vst [vmem:[#allocation2 + $0x38] sm:$0xf] %v93
    %98 = vrot.lane.b32.xlu0 %v41, 110
    %v99 = vpop.permute.xlu0 %98
    %100 = vrot.lane.b32.xlu0 %v42, 110
    %v101 = vpop.permute.xlu0 %100
    %102 = vrot.lane.b32.xlu0 %v43, 110
    %v103 = vpop.permute.xlu0 %102
    %vm104 = vcmp.lt.s32.totalorder %v53, 110
    %v105 = vsel %vm104, %v101, %v103
    %v106 = vsel %vm104, %v99, %v101
    %v107 = vsel %vm104, %v103, %v99
    %v108 = vpack.c.bf16 %v106, %v106
    %v109 = vpack.c.bf16 %v105, %v105
    %v110 = vpack.c.bf16 %v107, %v107
    %v114 = vunpack.c.l.b16 %v108
    %v115 = vunpack.c.l.b16 %v109
    %v116 = vunpack.c.l.b16 %v110
    %v117 = vpack.c.b16 %v115, %v114
    %v118 = vpack.c.b16 %v116, %v116
    %121 = vst [vmem:[#allocation2 + $0x48] sm:$0xff] %v117
    %122 = vst [vmem:[#allocation2 + $0x50] sm:$0xf] %v118
    %123 = vrot.lane.b32.xlu0 %v41, 109
    %v124 = vpop.permute.xlu0 %123
    %125 = vrot.lane.b32.xlu0 %v42, 109
    %v126 = vpop.permute.xlu0 %125
    %127 = vrot.lane.b32.xlu0 %v43, 109
    %v128 = vpop.permute.xlu0 %127
    %vm129 = vcmp.lt.s32.totalorder %v53, 109
    %v130 = vsel %vm129, %v126, %v128
    %v131 = vsel %vm129, %v124, %v126
    %v132 = vsel %vm129, %v128, %v124
    %v133 = vpack.c.bf16 %v131, %v131
    %v134 = vpack.c.bf16 %v130, %v130
    %v135 = vpack.c.bf16 %v132, %v132
    %v139 = vunpack.c.l.b16 %v133
    %v140 = vunpack.c.l.b16 %v134
    %v141 = vunpack.c.l.b16 %v135
    %v142 = vpack.c.b16 %v140, %v139
    %v143 = vpack.c.b16 %v141, %v141
    %146 = vst [vmem:[#allocation2 + $0x60] sm:$0xff] %v142
    %147 = vst [vmem:[#allocation2 + $0x68] sm:$0xf] %v143
    %148 = vrot.lane.b32.xlu0 %v41, 108
    %v149 = vpop.permute.xlu0 %148
    %150 = vrot.lane.b32.xlu0 %v42, 108
    %v151 = vpop.permute.xlu0 %150
    %152 = vrot.lane.b32.xlu0 %v43, 108
    %v153 = vpop.permute.xlu0 %152
    %vm154 = vcmp.lt.s32.totalorder %v53, 108
    %v155 = vsel %vm154, %v151, %v153
    %v156 = vsel %vm154, %v149, %v151
    %v157 = vsel %vm154, %v153, %v149
    %v158 = vpack.c.bf16 %v156, %v156
    %v159 = vpack.c.bf16 %v155, %v155
    %v160 = vpack.c.bf16 %v157, %v157
    %v164 = vunpack.c.l.b16 %v158
    %v165 = vunpack.c.l.b16 %v159
    %v166 = vunpack.c.l.b16 %v160
    %v167 = vpack.c.b16 %v165, %v164
    %v168 = vpack.c.b16 %v166, %v166
    %171 = vst [vmem:[#allocation2 + $0x78] sm:$0xff] %v167
    %172 = vst [vmem:[#allocation2 + $0x80] sm:$0xf] %v168
    %173 = vrot.lane.b32.xlu0 %v41, 92
    %v174 = vpop.permute.xlu0 %173
    %175 = vrot.lane.b32.xlu0 %v42, 92
    %v176 = vpop.permute.xlu0 %175
    %177 = vrot.lane.b32.xlu0 %v43, 92
    %v178 = vpop.permute.xlu0 %177
    %vm179 = vcmp.lt.s32.totalorder %v53, 92
    %v180 = vsel %vm179, %v176, %v178
    %v181 = vsel %vm179, %v174, %v176
    %v182 = vsel %vm179, %v178, %v174
    %v183 = vpack.c.bf16 %v181, %v181
    %v184 = vpack.c.bf16 %v180, %v180
    %v185 = vpack.c.bf16 %v182, %v182
    %v189 = vunpack.c.l.b16 %v183
    %v190 = vunpack.c.l.b16 %v184
    %v191 = vunpack.c.l.b16 %v185
    %v192 = vpack.c.b16 %v190, %v189
    %v193 = vpack.c.b16 %v191, %v191
    %196 = vst [vmem:[#allocation2 + $0x90] sm:$0xff] %v192
    %197 = vst [vmem:[#allocation2 + $0x98] sm:$0xf] %v193
    %198 = vrot.lane.b32.xlu0 %v41, 91
    %v199 = vpop.permute.xlu0 %198
    %200 = vrot.lane.b32.xlu0 %v42, 91
    %v201 = vpop.permute.xlu0 %200
    %202 = vrot.lane.b32.xlu0 %v43, 91
    %v203 = vpop.permute.xlu0 %202
    %vm204 = vcmp.lt.s32.totalorder %v53, 91
    %v205 = vsel %vm204, %v201, %v203
    %v206 = vsel %vm204, %v199, %v201
    %v207 = vsel %vm204, %v203, %v199
    %v208 = vpack.c.bf16 %v206, %v206
    %v209 = vpack.c.bf16 %v205, %v205
    %v210 = vpack.c.bf16 %v207, %v207
    %v214 = vunpack.c.l.b16 %v208
    %v215 = vunpack.c.l.b16 %v209
    %v216 = vunpack.c.l.b16 %v210
    %v217 = vpack.c.b16 %v215, %v214
    %v218 = vpack.c.b16 %v216, %v216
    %221 = vst [vmem:[#allocation2 + $0xa8] sm:$0xff] %v217
    %222 = vst [vmem:[#allocation2 + $0xb0] sm:$0xf] %v218
    %223 = vrot.lane.b32.xlu0 %v41, 90
    %v224 = vpop.permute.xlu0 %223
    %225 = vrot.lane.b32.xlu0 %v42, 90
    %v226 = vpop.permute.xlu0 %225
    %227 = vrot.lane.b32.xlu0 %v43, 90
    %v228 = vpop.permute.xlu0 %227
    %vm229 = vcmp.lt.s32.totalorder %v53, 90
    %v230 = vsel %vm229, %v226, %v228
    %v231 = vsel %vm229, %v224, %v226
    %v232 = vsel %vm229, %v228, %v224
    %v233 = vpack.c.bf16 %v231, %v231
    %v234 = vpack.c.bf16 %v230, %v230
    %v235 = vpack.c.bf16 %v232, %v232
    %v239 = vunpack.c.l.b16 %v233
    %v240 = vunpack.c.l.b16 %v234
    %v241 = vunpack.c.l.b16 %v235
    %v242 = vpack.c.b16 %v240, %v239
    %v243 = vpack.c.b16 %v241, %v241
    %246 = vst [vmem:[#allocation2 + $0xc0] sm:$0xff] %v242
    %247 = vst [vmem:[#allocation2 + $0xc8] sm:$0xf] %v243
    %s248 = scalar_lea.vmem [#allocation6], 12
    %v249 = vld [vmem:[%s248] sm:$0xff]
    %v250 = vld [vmem:[%s248 + $0x8] sm:$0xf]
    %v251 = vunpack.c.l.bf16 %v249
    %v252 = vunpack.c.h.bf16 %v249
    %v253 = vunpack.c.l.bf16 %v250
    %254 = vst [vmem:[#allocation2 + $0xc] sm:$0xff] %v249
    %255 = vst [vmem:[#allocation2 + $0x14] sm:$0xf] %v250
    %256 = vrot.lane.b32.xlu0 %v251, 127
    %v257 = vpop.permute.xlu0 %256
    %258 = vrot.lane.b32.xlu0 %v252, 127
    %v259 = vpop.permute.xlu0 %258
    %260 = vrot.lane.b32.xlu0 %v253, 127
    %v261 = vpop.permute.xlu0 %260
    %v262 = vsel %vm54, %v259, %v261
    %v263 = vsel %vm54, %v257, %v259
    %v264 = vsel %vm54, %v261, %v257
    %v265 = vpack.c.bf16 %v263, %v263
    %v266 = vpack.c.bf16 %v262, %v262
    %v267 = vpack.c.bf16 %v264, %v264
    %v271 = vunpack.c.l.b16 %v265
    %v272 = vunpack.c.l.b16 %v266
    %v273 = vunpack.c.l.b16 %v267
    %v274 = vpack.c.b16 %v272, %v271
    %v275 = vpack.c.b16 %v273, %v273
    %278 = vst [vmem:[#allocation2 + $0x24] sm:$0xff] %v274
    %279 = vst [vmem:[#allocation2 + $0x2c] sm:$0xf] %v275
    %280 = vrot.lane.b32.xlu0 %v251, 126
    %v281 = vpop.permute.xlu0 %280
    %282 = vrot.lane.b32.xlu0 %v252, 126
    %v283 = vpop.permute.xlu0 %282
    %284 = vrot.lane.b32.xlu0 %v253, 126
    %v285 = vpop.permute.xlu0 %284
    %v286 = vsel %vm79, %v283, %v285
    %v287 = vsel %vm79, %v281, %v283
    %v288 = vsel %vm79, %v285, %v281
    %v289 = vpack.c.bf16 %v287, %v287
    %v290 = vpack.c.bf16 %v286, %v286
    %v291 = vpack.c.bf16 %v288, %v288
    %v295 = vunpack.c.l.b16 %v289
    %v296 = vunpack.c.l.b16 %v290
    %v297 = vunpack.c.l.b16 %v291
    %v298 = vpack.c.b16 %v296, %v295
    %v299 = vpack.c.b16 %v297, %v297
    %302 = vst [vmem:[#allocation2 + $0x3c] sm:$0xff] %v298
    %303 = vst [vmem:[#allocation2 + $0x44] sm:$0xf] %v299
    %304 = vrot.lane.b32.xlu0 %v251, 110
    %v305 = vpop.permute.xlu0 %304
    %306 = vrot.lane.b32.xlu0 %v252, 110
    %v307 = vpop.permute.xlu0 %306
    %308 = vrot.lane.b32.xlu0 %v253, 110
    %v309 = vpop.permute.xlu0 %308
    %v310 = vsel %vm104, %v307, %v309
    %v311 = vsel %vm104, %v305, %v307
    %v312 = vsel %vm104, %v309, %v305
    %v313 = vpack.c.bf16 %v311, %v311
    %v314 = vpack.c.bf16 %v310, %v310
    %v315 = vpack.c.bf16 %v312, %v312
    %v319 = vunpack.c.l.b16 %v313
    %v320 = vunpack.c.l.b16 %v314
    %v321 = vunpack.c.l.b16 %v315
    %v322 = vpack.c.b16 %v320, %v319
    %v323 = vpack.c.b16 %v321, %v321
    %326 = vst [vmem:[#allocation2 + $0x54] sm:$0xff] %v322
    %327 = vst [vmem:[#allocation2 + $0x5c] sm:$0xf] %v323
    %328 = vrot.lane.b32.xlu0 %v251, 109
    %v329 = vpop.permute.xlu0 %328
    %330 = vrot.lane.b32.xlu0 %v252, 109
    %v331 = vpop.permute.xlu0 %330
    %332 = vrot.lane.b32.xlu0 %v253, 109
    %v333 = vpop.permute.xlu0 %332
    %v334 = vsel %vm129, %v331, %v333
    %v335 = vsel %vm129, %v329, %v331
    %v336 = vsel %vm129, %v333, %v329
    %v337 = vpack.c.bf16 %v335, %v335
    %v338 = vpack.c.bf16 %v334, %v334
    %v339 = vpack.c.bf16 %v336, %v336
    %v343 = vunpack.c.l.b16 %v337
    %v344 = vunpack.c.l.b16 %v338
    %v345 = vunpack.c.l.b16 %v339
    %v346 = vpack.c.b16 %v344, %v343
    %v347 = vpack.c.b16 %v345, %v345
    %350 = vst [vmem:[#allocation2 + $0x6c] sm:$0xff] %v346
    %351 = vst [vmem:[#allocation2 + $0x74] sm:$0xf] %v347
    %352 = vrot.lane.b32.xlu0 %v251, 108
    %v353 = vpop.permute.xlu0 %352
    %354 = vrot.lane.b32.xlu0 %v252, 108
    %v355 = vpop.permute.xlu0 %354
    %356 = vrot.lane.b32.xlu0 %v253, 108
    %v357 = vpop.permute.xlu0 %356
    %v358 = vsel %vm154, %v355, %v357
    %v359 = vsel %vm154, %v353, %v355
    %v360 = vsel %vm154, %v357, %v353
    %v361 = vpack.c.bf16 %v359, %v359
    %v362 = vpack.c.bf16 %v358, %v358
    %v363 = vpack.c.bf16 %v360, %v360
    %v367 = vunpack.c.l.b16 %v361
    %v368 = vunpack.c.l.b16 %v362
    %v369 = vunpack.c.l.b16 %v363
    %v370 = vpack.c.b16 %v368, %v367
    %v371 = vpack.c.b16 %v369, %v369
    %374 = vst [vmem:[#allocation2 + $0x84] sm:$0xff] %v370
    %375 = vst [vmem:[#allocation2 + $0x8c] sm:$0xf] %v371
    %376 = vrot.lane.b32.xlu0 %v251, 92
    %v377 = vpop.permute.xlu0 %376
    %378 = vrot.lane.b32.xlu0 %v252, 92
    %v379 = vpop.permute.xlu0 %378
    %380 = vrot.lane.b32.xlu0 %v253, 92
    %v381 = vpop.permute.xlu0 %380
    %v382 = vsel %vm179, %v379, %v381
    %v383 = vsel %vm179, %v377, %v379
    %v384 = vsel %vm179, %v381, %v377
    %v385 = vpack.c.bf16 %v383, %v383
    %v386 = vpack.c.bf16 %v382, %v382
    %v387 = vpack.c.bf16 %v384, %v384
    %v391 = vunpack.c.l.b16 %v385
    %v392 = vunpack.c.l.b16 %v386
    %v393 = vunpack.c.l.b16 %v387
    %v394 = vpack.c.b16 %v392, %v391
    %v395 = vpack.c.b16 %v393, %v393
    %398 = vst [vmem:[#allocation2 + $0x9c] sm:$0xff] %v394
    %399 = vst [vmem:[#allocation2 + $0xa4] sm:$0xf] %v395
    %400 = vrot.lane.b32.xlu0 %v251, 91
    %v401 = vpop.permute.xlu0 %400
    %402 = vrot.lane.b32.xlu0 %v252, 91
    %v403 = vpop.permute.xlu0 %402
    %404 = vrot.lane.b32.xlu0 %v253, 91
    %v405 = vpop.permute.xlu0 %404
    %v406 = vsel %vm204, %v403, %v405
    %v407 = vsel %vm204, %v401, %v403
    %v408 = vsel %vm204, %v405, %v401
    %v409 = vpack.c.bf16 %v407, %v407
    %v410 = vpack.c.bf16 %v406, %v406
    %v411 = vpack.c.bf16 %v408, %v408
    %v415 = vunpack.c.l.b16 %v409
    %v416 = vunpack.c.l.b16 %v410
    %v417 = vunpack.c.l.b16 %v411
    %v418 = vpack.c.b16 %v416, %v415
    %v419 = vpack.c.b16 %v417, %v417
    %422 = vst [vmem:[#allocation2 + $0xb4] sm:$0xff] %v418
    %423 = vst [vmem:[#allocation2 + $0xbc] sm:$0xf] %v419
    %424 = vrot.lane.b32.xlu0 %v251, 90
    %v425 = vpop.permute.xlu0 %424
    %426 = vrot.lane.b32.xlu0 %v252, 90
    %v427 = vpop.permute.xlu0 %426
    %428 = vrot.lane.b32.xlu0 %v253, 90
    %v429 = vpop.permute.xlu0 %428
    %v430 = vsel %vm229, %v427, %v429
    %v431 = vsel %vm229, %v425, %v427
    %v432 = vsel %vm229, %v429, %v425
    %v433 = vpack.c.bf16 %v431, %v431
    %v434 = vpack.c.bf16 %v430, %v430
    %v435 = vpack.c.bf16 %v432, %v432
    %v439 = vunpack.c.l.b16 %v433
    %v440 = vunpack.c.l.b16 %v434
    %v441 = vunpack.c.l.b16 %v435
    %v442 = vpack.c.b16 %v440, %v439
    %v443 = vpack.c.b16 %v441, %v441
    %446 = vst [vmem:[#allocation2 + $0xcc] sm:$0xff] %v442
    %447 = vst [vmem:[#allocation2 + $0xd4] sm:$0xf] %v443
    %v448 = vld [vmem:[#allocation3] sm:$0xf]
    %v449 = vld [vmem:[#allocation2] sm:$0xff]
    %v450 = vld [vmem:[#allocation2 + $0x8] sm:$0xff]
    %v451 = vld [vmem:[#allocation2 + $0x10] sm:$0xff]
    %v452 = vld [vmem:[#allocation2 + $0x18] sm:$0xff]
    %v453 = vld [vmem:[#allocation2 + $0x20] sm:$0xff]
    %v454 = vld [vmem:[#allocation2 + $0x28] sm:$0xff]
    %v455 = vld [vmem:[#allocation2 + $0x30] sm:$0xff]
    %v456 = vld [vmem:[#allocation2 + $0x38] sm:$0xff]
    %v457 = vld [vmem:[#allocation2 + $0x40] sm:$0xff]
    %v458 = vld [vmem:[#allocation2 + $0x48] sm:$0xff]
    %v459 = vld [vmem:[#allocation2 + $0x50] sm:$0xff]
    %v460 = vld [vmem:[#allocation2 + $0x58] sm:$0xff]
    %v461 = vld [vmem:[#allocation2 + $0x60] sm:$0xff]
    %v462 = vld [vmem:[#allocation2 + $0x68] sm:$0xff]
    %v463 = vld [vmem:[#allocation2 + $0x70] sm:$0xff]
    %v464 = vld [vmem:[#allocation2 + $0x78] sm:$0xff]
    %v465 = vld [vmem:[#allocation2 + $0x80] sm:$0xff]
    %v466 = vld [vmem:[#allocation2 + $0x88] sm:$0xff]
    %v467 = vld [vmem:[#allocation2 + $0x90] sm:$0xff]
    %v468 = vld [vmem:[#allocation2 + $0x98] sm:$0xff]
    %v469 = vld [vmem:[#allocation2 + $0xa0] sm:$0xff]
    %v470 = vld [vmem:[#allocation2 + $0xa8] sm:$0xff]
    %v471 = vld [vmem:[#allocation2 + $0xb0] sm:$0xff]
    %v472 = vld [vmem:[#allocation2 + $0xb8] sm:$0xff]
    %v473 = vld [vmem:[#allocation2 + $0xc0] sm:$0xff]
    %v474 = vld [vmem:[#allocation2 + $0xc8] sm:$0xff]
    %v475 = vld [vmem:[#allocation2 + $0xd0] sm:$0xff]
    %v503 = vunpack.c.l.b16 %v449
    %v504 = vunpack.c.h.b16 %v449
    %v505 = vunpack.c.l.b16 %v450
    %v506 = vunpack.c.h.b16 %v450
    %v507 = vunpack.c.l.b16 %v451
    %v508 = vunpack.c.h.b16 %v451
    %v509 = vunpack.c.l.b16 %v452
    %v510 = vunpack.c.h.b16 %v452
    %v511 = vunpack.c.l.b16 %v453
    %v512 = vunpack.c.h.b16 %v453
    %v513 = vunpack.c.l.b16 %v454
    %v514 = vunpack.c.h.b16 %v454
    %v515 = vunpack.c.l.b16 %v455
    %v516 = vunpack.c.h.b16 %v455
    %v517 = vunpack.c.l.b16 %v456
    %v518 = vunpack.c.h.b16 %v456
    %v519 = vunpack.c.l.b16 %v457
    %v520 = vunpack.c.h.b16 %v457
    %v521 = vunpack.c.l.b16 %v458
    %v522 = vunpack.c.h.b16 %v458
    %v523 = vunpack.c.l.b16 %v459
    %v524 = vunpack.c.h.b16 %v459
    %v525 = vunpack.c.l.b16 %v460
    %v526 = vunpack.c.h.b16 %v460
    %v527 = vunpack.c.l.b16 %v461
    %v528 = vunpack.c.h.b16 %v461
    %v529 = vunpack.c.l.b16 %v462
    %v530 = vunpack.c.h.b16 %v462
    %v531 = vunpack.c.l.b16 %v463
    %v532 = vunpack.c.h.b16 %v463
    %v533 = vunpack.c.l.b16 %v464
    %v534 = vunpack.c.h.b16 %v464
    %v535 = vunpack.c.l.b16 %v465
    %v536 = vunpack.c.h.b16 %v465
    %v537 = vunpack.c.l.b16 %v466
    %v538 = vunpack.c.h.b16 %v466
    %v539 = vunpack.c.l.b16 %v467
    %v540 = vunpack.c.h.b16 %v467
    %v541 = vunpack.c.l.b16 %v468
    %v542 = vunpack.c.h.b16 %v468
    %v543 = vunpack.c.l.b16 %v469
    %v544 = vunpack.c.h.b16 %v469
    %v545 = vunpack.c.l.b16 %v470
    %v546 = vunpack.c.h.b16 %v470
    %v547 = vunpack.c.l.b16 %v471
    %v548 = vunpack.c.h.b16 %v471
    %v549 = vunpack.c.l.b16 %v472
    %v550 = vunpack.c.h.b16 %v472
    %v551 = vunpack.c.l.b16 %v473
    %v552 = vunpack.c.h.b16 %v473
    %v553 = vunpack.c.l.b16 %v474
    %v554 = vunpack.c.h.b16 %v474
    %v555 = vunpack.c.l.b16 %v475
    %v556 = vunpack.c.h.b16 %v475
    %v557 = vpack.c.b16 %v509, %v503
    %v558 = vpack.c.b16 %v510, %v504
    %v559 = vpack.c.b16 %v511, %v505
    %v560 = vpack.c.b16 %v512, %v506
    %v561 = vpack.c.b16 %v513, %v507
    %v562 = vpack.c.b16 %v514, %v508
    %v563 = vpack.c.b16 %v521, %v515
    %v564 = vpack.c.b16 %v522, %v516
    %v565 = vpack.c.b16 %v523, %v517
    %v566 = vpack.c.b16 %v524, %v518
    %v567 = vpack.c.b16 %v525, %v519
    %v568 = vpack.c.b16 %v526, %v520
    %v569 = vpack.c.b16 %v533, %v527
    %v570 = vpack.c.b16 %v534, %v528
    %v571 = vpack.c.b16 %v535, %v529
    %v572 = vpack.c.b16 %v536, %v530
    %v573 = vpack.c.b16 %v537, %v531
    %v574 = vpack.c.b16 %v538, %v532
    %v575 = vpack.c.b16 %v545, %v539
    %v576 = vpack.c.b16 %v546, %v540
    %v577 = vpack.c.b16 %v547, %v541
    %v578 = vpack.c.b16 %v548, %v542
    %v579 = vpack.c.b16 %v549, %v543
    %v580 = vpack.c.b16 %v550, %v544
    %v581 = vpack.c.b16 %v551, %v551
    %v582 = vpack.c.b16 %v552, %v552
    %v583 = vpack.c.b16 %v553, %v553
    %v584 = vpack.c.b16 %v554, %v554
    %v585 = vpack.c.b16 %v555, %v555
    %v586 = vpack.c.b16 %v556, %v556
    %vm611 = vcmask 588800
    %v613 = vsel %vm611, %v448, 0
    %vm615 = vcmask 1043456
    %v617 = vsel %vm615, %v581, 0
    %v620 = vsel %vm615, %v582, 0
    %v623 = vsel %vm615, %v583, 0
    %v626 = vsel %vm615, %v584, 0
    %v629 = vsel %vm615, %v585, 0
    %v632 = vsel %vm615, %v586, 0
    %634 = vmatprep.subr.bf16.mxu0 %v558
    %635 = vmatpush1.bf16.msra.mxu0 %v557
    %636 = vmatprep.subr.bf16.mxu0 %v564
    %637 = vmatpush1.bf16.msra.mxu0 %v563
    %638 = vmatprep.subr.bf16.mxu0 %v570
    %639 = vmatpush1.bf16.msra.mxu0 %v569
    %640 = vmatprep.subr.bf16.mxu0 %v576
    %641 = vmatpush1.bf16.msra.mxu0 %v575
    %642 = vmatprep.subr.bf16.mxu0 %v620
    %643 = vmatpush1.bf16.msra.mxu0 %v617
    %644 = vmatprep.subr.bf16.mxu0 0
    %645 = vmatpush1.bf16.msra.mxu0 0
    %646 = vmatprep.subr.bf16.mxu0 0
    %647 = vmatpush1.bf16.msra.mxu0 0
    %648 = vmatprep.subr.bf16.mxu0 0
    %649 = vmatpush1.bf16.msra.mxu0 0
    %650 = vmatprep.subr.bf16.mxu0 0
    %651 = vmatpush1.bf16.msra.mxu0 0
    %652 = vmatprep.subr.bf16.mxu0 0
    %653 = vmatpush1.bf16.msra.mxu0 0
    %654 = vmatprep.subr.bf16.mxu0 0
    %655 = vmatpush1.bf16.msra.mxu0 0
    %656 = vmatprep.subr.bf16.mxu0 0
    %657 = vmatpush1.bf16.msra.mxu0 0
    %658 = vmatprep.subr.bf16.mxu0 0
    %659 = vmatpush1.bf16.msra.mxu0 0
    %660 = vmatprep.subr.bf16.mxu0 0
    %661 = vmatpush1.bf16.msra.mxu0 0
    %662 = vmatprep.subr.bf16.mxu0 0
    %663 = vmatpush1.bf16.msra.mxu0 0
    %664 = vmatprep.subr.bf16.mxu0 0
    %665 = vmatpush1.bf16.msra.mxu0 0
    %666 = vmatprep.mubr.bf16.mxu0 0
    %667 = vmatmul.mubr.bf16.gmra.mrb[0].mxu0 %v613
    %v668 = vpop.f32.mrb[0].mxu0
    %v669 = vadd.f32 0.0, %v668
    %v670 = vpop.f32.mrb[0].mxu0
    %v671 = vadd.f32 0.0, %v670
    %v672 = vpop.f32.mrb[0].mxu0
    %v673 = vpop.f32.mrb[0].mxu0
    %674 = vdwg.mxu0
    %675 = vmatprep.subr.bf16.mxu0 %v560
    %676 = vmatpush1.bf16.msra.mxu0 %v559
    %677 = vmatprep.subr.bf16.mxu0 %v566
    %678 = vmatpush1.bf16.msra.mxu0 %v565
    %679 = vmatprep.subr.bf16.mxu0 %v572
    %680 = vmatpush1.bf16.msra.mxu0 %v571
    %681 = vmatprep.subr.bf16.mxu0 %v578
    %682 = vmatpush1.bf16.msra.mxu0 %v577
    %683 = vmatprep.subr.bf16.mxu0 %v626
    %684 = vmatpush1.bf16.msra.mxu0 %v623
    %685 = vmatprep.subr.bf16.mxu0 0
    %686 = vmatpush1.bf16.msra.mxu0 0
    %687 = vmatprep.subr.bf16.mxu0 0
    %688 = vmatpush1.bf16.msra.mxu0 0
    %689 = vmatprep.subr.bf16.mxu0 0
    %690 = vmatpush1.bf16.msra.mxu0 0
    %691 = vmatprep.subr.bf16.mxu0 0
    %692 = vmatpush1.bf16.msra.mxu0 0
    %693 = vmatprep.subr.bf16.mxu0 0
    %694 = vmatpush1.bf16.msra.mxu0 0
    %695 = vmatprep.subr.bf16.mxu0 0
    %696 = vmatpush1.bf16.msra.mxu0 0
    %697 = vmatprep.subr.bf16.mxu0 0
    %698 = vmatpush1.bf16.msra.mxu0 0
    %699 = vmatprep.subr.bf16.mxu0 0
    %700 = vmatpush1.bf16.msra.mxu0 0
    %701 = vmatprep.subr.bf16.mxu0 0
    %702 = vmatpush1.bf16.msra.mxu0 0
    %703 = vmatprep.subr.bf16.mxu0 0
    %704 = vmatpush1.bf16.msra.mxu0 0
    %705 = vmatprep.subr.bf16.mxu0 0
    %706 = vmatpush1.bf16.msra.mxu0 0
    %707 = vmatprep.mubr.bf16.mxu0 0
    %708 = vmatmul.mubr.bf16.gmra.mrb[0].mxu0 %v613
    %v709 = vpop.f32.mrb[0].mxu0
    %v710 = vadd.f32 0.0, %v709
    %v711 = vpop.f32.mrb[0].mxu0
    %v712 = vadd.f32 0.0, %v711
    %v713 = vpop.f32.mrb[0].mxu0
    %v714 = vpop.f32.mrb[0].mxu0
    %715 = vdwg.mxu0
    %716 = vmatprep.subr.bf16.mxu0 %v562
    %717 = vmatpush1.bf16.msra.mxu0 %v561
    %718 = vmatprep.subr.bf16.mxu0 %v568
    %719 = vmatpush1.bf16.msra.mxu0 %v567
    %720 = vmatprep.subr.bf16.mxu0 %v574
    %721 = vmatpush1.bf16.msra.mxu0 %v573
    %722 = vmatprep.subr.bf16.mxu0 %v580
    %723 = vmatpush1.bf16.msra.mxu0 %v579
    %724 = vmatprep.subr.bf16.mxu0 %v632
    %725 = vmatpush1.bf16.msra.mxu0 %v629
    %726 = vmatprep.subr.bf16.mxu0 0
    %727 = vmatpush1.bf16.msra.mxu0 0
    %728 = vmatprep.subr.bf16.mxu0 0
    %729 = vmatpush1.bf16.msra.mxu0 0
    %730 = vmatprep.subr.bf16.mxu0 0
    %731 = vmatpush1.bf16.msra.mxu0 0
    %732 = vmatprep.subr.bf16.mxu0 0
    %733 = vmatpush1.bf16.msra.mxu0 0
    %734 = vmatprep.subr.bf16.mxu0 0
    %735 = vmatpush1.bf16.msra.mxu0 0
    %736 = vmatprep.subr.bf16.mxu0 0
    %737 = vmatpush1.bf16.msra.mxu0 0
    %738 = vmatprep.subr.bf16.mxu0 0
    %739 = vmatpush1.bf16.msra.mxu0 0
    %740 = vmatprep.subr.bf16.mxu0 0
    %741 = vmatpush1.bf16.msra.mxu0 0
    %742 = vmatprep.subr.bf16.mxu0 0
    %743 = vmatpush1.bf16.msra.mxu0 0
    %744 = vmatprep.subr.bf16.mxu0 0
    %745 = vmatpush1.bf16.msra.mxu0 0
    %746 = vmatprep.subr.bf16.mxu0 0
    %747 = vmatpush1.bf16.msra.mxu0 0
    %748 = vmatprep.mubr.bf16.mxu0 0
    %749 = vmatmul.mubr.bf16.gmra.mrb[0].mxu0 %v613
    %v750 = vpop.f32.mrb[0].mxu0
    %v751 = vadd.f32 0.0, %v750
    %v752 = vpop.f32.mrb[0].mxu0
    %v753 = vadd.f32 0.0, %v752
    %v754 = vpop.f32.mrb[0].mxu0
    %v755 = vpop.f32.mrb[0].mxu0
    %756 = vdwg.mxu0
    %757 = vst [vmem:[#allocation8] sm:$0xff] %v669
    %758 = vst [vmem:[#allocation8 + $0x8] sm:$0xff] %v671
    %759 = vst [vmem:[#allocation8 + $0x10] sm:$0xff] %v710
    %s760 = scalar_lea.vmem [#allocation8], 24
    %761 = vst [vmem:[%s760] sm:$0xff] %v712
    %762 = vst [vmem:[%s760 + $0x8] sm:$0xff] %v751
    %763 = vst [vmem:[%s760 + $0x10] sm:$0xff] %v753
    // Predicated region
    $region18: #{reconv_forward.1} parent=1 // pred_check
      _
    $region19: #{reconv_forward.1} parent=1 // pred_check_branch
      %765 = sbr.rel (0) target = $region21
    $region20: #{reconv_forward.1} parent=1 // pred_region
      %s767 = ssub.s32 768, 768
      %768 = vsyncadd [#allocation5], %s767
      %s769 = sshll.u32 [#allocation8], 4
      %s770 = int_to_ptr.vmem [resolvable:$true] %s769
      %775 = dma.vmem_to_hbm [thread:$0]  %s770, 768, %s2, [#allocation5], 384, 384, 24
    $region21: #{reconv_forward.1} parent=1 // pred_fallthru
      _
    // Predicated region
    $region22: #{reconv_forward.1} parent=1 // pred_check
      _
    $region23: #{reconv_forward.1} parent=1 // pred_check_branch
      %777 = sbr.rel (0) target = $region25
    $region24: #{reconv_forward.1} parent=1 // pred_region
      %778 = dma.done [#allocation5], 768
    $region25: #{reconv_forward.1} parent=1 // pred_fallthru
      _
    %779 = vsyncpa [#allocation4], 1
    %780 = vsyncpa [#allocation7], 1
    %781 = vsyncpa [#allocation5], 1

</llo_original>
